<compile_context>
chip_gen: v7x
topology: tpu7x:2x2x1
jax: 0.10.0
libtpu: 0.0.40
codegen_flags: <defaults>
</compile_context>

<pallas_src>
import math

import jax
import jax.numpy as jnp
from jax.experimental import pallas as pl
from jax.experimental.pallas import tpu as pltpu


_TARGET_BLOCK_BYTES = 2 * 1024 * 1024   # ~2 MiB/block; x4 (dbl-buffered in+out) stays tiny
_HARD_BLOCK_BYTES = 4 * 1024 * 1024     # absolute per-block cap (v7x 64 MiB VMEM safe)
_SMALL_INPUT_BYTES = 256 * 1024         # below this, XLA's native transpose wins


def _copy_kernel(x_ref, o_ref):
    # The axis swap lives in the BlockSpec index_maps; body is a pure copy.
    o_ref[...] = x_ref[...]


def _relayout_kernel(x_ref, o_ref):
    # Fallback: (1, d0, 1, d1, inner) -> (1, d1, 1, d0, inner) on-chip.
    # TODO(synk): sub-32-bit dtypes with small d0/d1 may relayout slowly here;
    # the lane-dense copy path above handles them natively.
    o_ref[...] = jnp.transpose(x_ref[...], (0, 3, 2, 1, 4))


def _largest_divisor_at_most(n, cap):
    cap = max(1, min(n, cap))
    for b in range(cap, 0, -1):
        if n % b == 0:
            return b
    return 1


def _transpose_copy_path(x, outer, d0, mid, d1, inner, itemsize):
    """Lane-dense pure-copy path: axis swap is done purely by DMA addressing."""
    # Tile the (lane-dense) inner axis: largest 128-multiple divisor of `inner`
    # whose (d0, ti) slab stays under the target block size.
    max_ti_elems = max(128, _TARGET_BLOCK_BYTES // max(1, d0 * itemsize))
    ti = None
    for mult in range(inner // 128, 0, -1):
        cand = mult * 128
        if inner % cand == 0 and cand <= max_ti_elems:
            ti = cand
            break
    if ti is None:
        ti = 128
    if d0 * ti * itemsize > _HARD_BLOCK_BYTES:
        # TODO(synk): also tile d0 (sublane dim) for very large d0*inner slabs.
        return None
    n_t = inner // ti

    # Fuse outer rows until the block reaches ~_TARGET_BLOCK_BYTES.
    max_bo = max(1, _TARGET_BLOCK_BYTES // (d0 * ti * itemsize))
    bo = _largest_divisor_at_most(outer, max_bo)
    n_o = outer // bo

    # Input viewed as (outer, d0, mid*d1*inner): each block is d0 strided runs
    # of `ti` contiguous elements (strided read).
    x3 = x.reshape(outer, d0, mid * d1 * inner)

    # Output viewed as (outer, d1*mid, d0, inner): each block is a fully
    # contiguous (d0, ti) slab per fused outer row (contiguous write), and its
    # last two block dims are (full d0, 128-multiple) -> unmasked, lane-dense
    # stores.
    out4 = pl.pallas_call(
        _copy_kernel,
        out_shape=jax.ShapeDtypeStruct((outer, d1 * mid, d0, inner), x.dtype),
        grid_spec=pltpu.PrefetchScalarGridSpec(
            num_scalar_prefetch=0,
            grid=(n_o, d1, mid, n_t),
            in_specs=[
                pl.BlockSpec(
                    (bo, d0, ti),
                    lambda o, j, m, t: (o, 0, (m * d1 + j) * n_t + t),
                ),
            ],
            out_specs=pl.BlockSpec(
                (bo, None, d0, ti),
                lambda o, j, m, t: (o, j * mid + m, 0, t),
            ),
        ),
        compiler_params=pltpu.CompilerParams(
            dimension_semantics=("parallel", "parallel", "arbitrary", "arbitrary"),
        ),
    )(x3)
    return out4  # caller reshapes to the swapped shape


def _transpose_relayout_path(x, outer, d0, mid, d1, inner, itemsize):
    """Conservative fallback for narrow-`inner` shapes: on-chip relayout of one
    (d0, d1, inner) slab per grid step (last two block dims stay full-extent,
    so the (8,128) constraint is always satisfied)."""
    block_bytes = d0 * d1 * inner * itemsize
    if block_bytes > _HARD_BLOCK_BYTES:
        return None
    x5 = x.reshape(outer, d0, mid, d1, inner)
    out5 = pl.pallas_call(
        _relayout_kernel,
        out_shape=jax.ShapeDtypeStruct((outer, d1, mid, d0, inner), x.dtype),
        grid_spec=pltpu.PrefetchScalarGridSpec(
            num_scalar_prefetch=0,
            grid=(outer, mid),
            in_specs=[
                pl.BlockSpec((1, d0, 1, d1, inner), lambda o, m: (o, 0, m, 0, 0)),
            ],
            out_specs=pl.BlockSpec((1, d1, 1, d0, inner), lambda o, m: (o, 0, m, 0, 0)),
        ),
        compiler_params=pltpu.CompilerParams(
            dimension_semantics=("parallel", "parallel"),
        ),
    )(x5)
    return out5  # caller reshapes to the swapped shape


def pallas_transpose(x, dim0: int, dim1: int, *, force_pallas: bool = False):
    """Equivalent of torch.Tensor.transpose(dim0, dim1)."""
    ndim = x.ndim
    dim0 = dim0 % ndim
    dim1 = dim1 % ndim
    if dim0 == dim1:
        return x
    if dim0 > dim1:
        dim0, dim1 = dim1, dim0

    shape = x.shape
    out_shape = list(shape)
    out_shape[dim0], out_shape[dim1] = out_shape[dim1], out_shape[dim0]
    out_shape = tuple(out_shape)

    outer = math.prod(shape[:dim0])
    d0 = shape[dim0]
    mid = math.prod(shape[dim0 + 1:dim1])
    d1 = shape[dim1]
    inner = math.prod(shape[dim1 + 1:])

    itemsize = jnp.dtype(x.dtype).itemsize
    total_bytes = x.size * itemsize

    # Small-input fast path: launch + pipeline prologue dwarf the copy itself.
    if not force_pallas and total_bytes < _SMALL_INPUT_BYTES:
        return jnp.swapaxes(x, dim0, dim1)

    if inner % 128 == 0:
        out = _transpose_copy_path(x, outer, d0, mid, d1, inner, itemsize)
        if out is not None:
            return out.reshape(out_shape)

    out = _transpose_relayout_path(x, outer, d0, mid, d1, inner, itemsize)
    if out is not None:
        return out.reshape(out_shape)

    # TODO(synk): tiles would exceed the per-block VMEM cap for this shape;
    # use XLA's native transpose rather than risking a VMEM OOM.
    return jnp.swapaxes(x, dim0, dim1)


class TransposePallas:
    """Mirror of the PyTorch Transpose module (no parameters)."""

    def __init__(self, dim0: int, dim1: int):
        self._name = "Transpose"
        self.dim0 = dim0
        self.dim1 = dim1

    def __call__(self, inputs, *, force_pallas: bool = False):
        return pallas_transpose(inputs, self.dim0, self.dim1,
                                force_pallas=force_pallas)


if __name__ == "__main__":
    key = jax.random.PRNGKey(0)
    k1, k2 = jax.random.split(key)

    mod = TransposePallas(dim0=1, dim1=2)

    # Case 1 (main lane-dense copy path): (batch=2, channels=4, seq=8, hidden=128);
    # inner = 128 -> axis swap done purely in the BlockSpec index maps.
    x1 = jax.random.normal(k1, (2, 4, 8, 128), dtype=jnp.float32)
    out1 = jax.block_until_ready(mod(x1, force_pallas=True))
    ref1 = jnp.swapaxes(x1, 1, 2)
    assert out1.shape == ref1.shape, (out1.shape, ref1.shape)
    assert out1.dtype == ref1.dtype, (out1.dtype, ref1.dtype)
    assert bool(jnp.all(out1 == ref1))

    # Case 2 (narrow-inner fallback path): NCHW (2, 4, 16, 16), Transpose(1, 2).
    x2 = jax.random.normal(k2, (2, 4, 16, 16), dtype=jnp.float32)
    out2 = jax.block_until_ready(mod(x2, force_pallas=True))
    ref2 = jnp.swapaxes(x2, 1, 2)
    assert out2.shape == ref2.shape, (out2.shape, ref2.shape)
    assert out2.dtype == ref2.dtype, (out2.dtype, ref2.dtype)
    assert bool(jnp.all(out2 == ref2))

    # Case 3 (small-input fast path, no Pallas call): same semantics.
    out3 = jax.block_until_ready(mod(x2))
    assert bool(jnp.all(out3 == ref2))

    print("KERNEL_OK")
</pallas_src>

<mosaic_0001>
module attributes {stable_mosaic.version = 11 : i64} {
  func.func @_copy_kernel(%arg0: i32, %arg1: i32, %arg2: i32, %arg3: i32, %arg4: memref<2x4x128xf32, #tpu.memory_space<vmem>>, %arg5: memref<2x1x4x128xf32, #tpu.memory_space<vmem>>) attributes {dimension_semantics = [#tpu.dimension_semantics<parallel>, #tpu.dimension_semantics<parallel>, #tpu.dimension_semantics<arbitrary>, #tpu.dimension_semantics<arbitrary>], iteration_bounds = array<i64: 1, 8, 1, 1>, scalar_prefetch = 0 : i64, scratch_operands = 0 : i64, tpu.core_type = #tpu.core_type<tc>, window_params = [{transform_indices = @transform_0, window_bounds = array<i64: 2, 4, 128>}, {transform_indices = @transform_1, window_bounds = array<i64: 2, 1, 4, 128>}]} {
    %c0 = arith.constant 0 : index
    %c0_0 = arith.constant 0 : index
    %c0_1 = arith.constant 0 : index
    %0 = vector.load %arg4[%c0, %c0_0, %c0_1] : memref<2x4x128xf32, #tpu.memory_space<vmem>>, vector<2x4x128xf32>
    %c0_2 = arith.constant 0 : index
    %c0_3 = arith.constant 0 : index
    %c0_4 = arith.constant 0 : index
    %c0_5 = arith.constant 0 : index
    %1 = vector.load %arg5[%c0_2, %c0_3, %c0_4, %c0_5] : memref<2x1x4x128xf32, #tpu.memory_space<vmem>>, vector<2x1x4x128xf32>
    %2 = vector.shape_cast %1 : vector<2x1x4x128xf32> to vector<2x4x128xf32>
    %3 = vector.shape_cast %0 : vector<2x4x128xf32> to vector<2x1x4x128xf32>
    tpu.vector_store %arg5[%c0_2, %c0_3, %c0_4, %c0_5], %3 {strides = array<i32>} : memref<2x1x4x128xf32, #tpu.memory_space<vmem>>, vector<2x1x4x128xf32>,
    return
  }
  func.func @transform_0(%arg0: i32, %arg1: i32, %arg2: i32, %arg3: i32) -> (i32, i32, i32) {
    %c8_i32 = arith.constant 8 : i32
    %0 = arith.muli %arg2, %c8_i32 : i32
    %1 = arith.addi %0, %arg1 : i32
    %c1_i32 = arith.constant 1 : i32
    %2 = arith.muli %1, %c1_i32 : i32
    %3 = arith.addi %2, %arg3 : i32
    %c0_i32 = arith.constant 0 : i32
    %c0_i32_0 = arith.constant 0 : i32
    return %arg0, %c0_i32, %3 : i32, i32, i32
  }
  func.func @transform_1(%arg0: i32, %arg1: i32, %arg2: i32, %arg3: i32) -> (i32, i32, i32, i32) {
    %c1_i32 = arith.constant 1 : i32
    %0 = arith.muli %arg1, %c1_i32 : i32
    %1 = arith.addi %0, %arg2 : i32
    %c0_i32 = arith.constant 0 : i32
    %c0_i32_0 = arith.constant 0 : i32
    return %arg0, %1, %c0_i32, %arg3 : i32, i32, i32, i32
  }
}

</mosaic_0001>

<llo_original>
// kernel: tpu_custom_call.1
$region0: #{tpu_custom_call.1}
  #allocation0 [shape = 'u32[]', space=smem, size = 0x4, offset = 0x4, fixed_abs, tag = 'smem constant byte address 0x4 - core index']
  #allocation1 [shape = 'u32[144,128]{1,0:T(1,128)}', space=vmem, size = 0x12000, scoped, tag = 'internal scratch']
  %s0 = inlined_call_operand.hbm [shape: f32[2,4,1024], index: 0, kind: input, shape index: {}]
  %s1 = inlined_call_operand.hbm [shape: f32[2,8,4,128], index: 1, kind: output, shape index: {}]
  %s2 = sld [smem:[#allocation0]]
  $region41: #{tpu_custom_call.1} parent=0
    _
  %s4 = ssub.s32 1, %s2
  %s5 = scalar_select 0, %s4, %s2
  $region1: #{tpu_custom_call.1} parent=0
    #allocation2 [shape = 'u8[8192]{0}', space=vmem, size = 0x2000, scoped, tag = 'input window, operand 0']
    #allocation3 [shape = 's32[2]{0}', space=sflag, size = 0x8, scoped, tag = 'scoped memory for tpu_custom_call.1']
    #allocation4 [shape = 's32[2]{0}', space=sflag, size = 0x8, scoped, tag = 'scoped memory for tpu_custom_call.1']
    #allocation5 [shape = 'u8[8192]{0}', space=vmem, size = 0x2000, scoped, tag = 'output window, operand 0']
    %6 = vsyncpa [#allocation3], 0
    %s7 = scalar_lea.sflag [#allocation3], 1
    %8 = vsyncpa %s7, 0
    %9 = vsyncpa [#allocation4], 0
    %s10 = scalar_lea.sflag [#allocation4], 1
    %11 = vsyncpa %s10, 0
    loop: start=0, step=1, limit=10
    $region2: #{tpu_custom_call.1} parent=1 // loop_pre_header
      _
    $region3: #{tpu_custom_call.1} parent=1 // loop_header
      %s13 = sphi 0, %s17
      %p14 = scmp.ge.s32.totalorder %s13, 10
      %s20 = sphi 0, %s46
      %s21 = sphi 0, %s42
      %s22 = sphi 0, %s38
      %s23 = sphi 0, %s34
      %s24 = sphi 0, %s20
      %s25 = sphi 0, %s21
      %s26 = sphi 0, %s22
      %s27 = sphi 0, %s23
      %s28 = sphi 0, %s24
      %s29 = sphi 0, %s25
      %s30 = sphi 0, %s26
      %s31 = sphi 0, %s27
      %s57 = sphi 0, %s59
      %s60 = sphi 0, %s57
      %s61 = sphi 0, %s60
      %s77 = sphi 0, %s61
      %s89 = sphi 0, %s91
      %s92 = sphi 0, %s89
      %s93 = sphi 0, %s92
      %s109 = sphi 0, %s93
    $region4: #{tpu_custom_call.1} parent=1 // loop_header_branch
      %16 = sbr.rel (%p14) target = $region8
    $region5: #{tpu_custom_call.1} parent=1 // loop_body
      %s18 = ssub.s32 %s13, 1
      %s19 = ssub.s32 %s13, 2
      %s32 = sadd.s32 1, %s23
      %p33 = scmp.ge.s32.totalorder %s32, 1
      %s34 = scalar_select %p33, 0, %s32
      %s35 = sadd.s32 1, %s22
      %s36 = scalar_select %p33, %s35, %s22
      %p37 = scmp.ge.s32.totalorder %s36, 1
      %s38 = scalar_select %p37, 0, %s36
      %s39 = sadd.s32 1, %s21
      %s40 = scalar_select %p37, %s39, %s21
      %p41 = scmp.ge.s32.totalorder %s40, 8
      %s42 = scalar_select %p41, 0, %s40
      %s43 = sadd.s32 1, %s20
      %s44 = scalar_select %p41, %s43, %s20
      %p45 = scmp.ge.s32.totalorder %s44, 1
      %s46 = scalar_select %p45, 0, %s44
      %s47 = smul.u32 %s22, 8
      %s48 = sadd.s32 %s47, %s21
      %s49 = sadd.s32 %s48, %s23
      %s50 = smul.u32 %s38, 8
      %s51 = sadd.s32 %s50, %s42
      %s52 = sadd.s32 %s51, %s34
      %s53 = ssub.s32 %s20, %s46
      %s54 = ssub.s32 %s49, %s52
      %s55 = sor.u32 %s53, %s54
      %p56 = scmp.eq.s32.totalorder %s55, 0
      %s58 = sadd.s32 %s57, 1
      %s59 = scalar_select %p56, %s57, %s58
      %p62 = pneg %p56
      %p63 = scmp.eq.s32.totalorder %s13, 7
      %p64 = por %p62, %p63
      %p65 = scmp.ne.s32.totalorder %s57, %s60
      %p66 = scmp.eq.s32.totalorder %s13, 0
      %p67 = por %p65, %p66
      %p68 = scmp.ne.s32.totalorder %s57, %s60
      %p69 = scmp.eq.s32.totalorder %s18, 7
      %p70 = por %p68, %p69
      %p71 = scmp.ne.s32.totalorder %s60, %s61
      %p72 = scmp.eq.s32.totalorder %s18, 0
      %p73 = por %p71, %p72
      %p74 = scmp.ne.s32.totalorder %s60, %s61
      %p75 = scmp.eq.s32.totalorder %s19, 7
      %p76 = por %p74, %p75
      %p78 = scmp.ne.s32.totalorder %s61, %s77
      %p79 = scmp.eq.s32.totalorder %s19, 0
      %p80 = por %p78, %p79
      %s81 = sadd.s32 %s21, %s22
      %s82 = sadd.s32 %s42, %s38
      %s83 = ssub.s32 %s20, %s46
      %s84 = ssub.s32 %s81, %s82
      %s85 = sor.u32 %s83, %s84
      %s86 = ssub.s32 %s23, %s34
      %s87 = sor.u32 %s85, %s86
      %p88 = scmp.eq.s32.totalorder %s87, 0
      %s90 = sadd.s32 %s89, 1
      %s91 = scalar_select %p88, %s89, %s90
      %p94 = pneg %p88
      %p95 = scmp.eq.s32.totalorder %s13, 7
      %p96 = por %p94, %p95
      %p97 = scmp.ne.s32.totalorder %s89, %s92
      %p98 = scmp.eq.s32.totalorder %s13, 0
      %p99 = por %p97, %p98
      %p100 = scmp.ne.s32.totalorder %s89, %s92
      %p101 = scmp.eq.s32.totalorder %s18, 7
      %p102 = por %p100, %p101
      %p103 = scmp.ne.s32.totalorder %s92, %s93
      %p104 = scmp.eq.s32.totalorder %s18, 0
      %p105 = por %p103, %p104
      %p106 = scmp.ne.s32.totalorder %s92, %s93
      %p107 = scmp.eq.s32.totalorder %s19, 7
      %p108 = por %p106, %p107
      %p110 = scmp.ne.s32.totalorder %s93, %s109
      %p111 = scmp.eq.s32.totalorder %s19, 0
      %p112 = por %p110, %p111
      %p113 = scmp.le.s32.totalorder 1, %s13
      %p114 = scmp.lt.s32.totalorder %s13, 9
      %p115 = pnand %p113, %p114
      %p116 = pneg %p115
      // Predicated region
      $region9: #{tpu_custom_call.1} parent=5 // pred_check
        _
      $region10: #{tpu_custom_call.1} parent=5 // pred_check_branch
        %118 = sbr.rel (%p115) target = $region12
      $region11: #{tpu_custom_call.1} parent=5 // pred_region
        %s119 = ssub.s32 %s13, 1
      $region12: #{tpu_custom_call.1} parent=5 // pred_fallthru
        _
      %p120 = scmp.lt.s32.totalorder %s13, 8
      // Predicated region
      $region13: #{tpu_custom_call.1} parent=5 // pred_check
        %p121 = pneg %p120
      $region14: #{tpu_custom_call.1} parent=5 // pred_check_branch
        %123 = sbr.rel (%p121) target = $region16
      $region15: #{tpu_custom_call.1} parent=5 // pred_region
        // Predicated region
        $region17: #{tpu_custom_call.1} parent=15 // pred_check
          %p124 = pneg %p67
        $region18: #{tpu_custom_call.1} parent=15 // pred_check_branch
          %126 = sbr.rel (%p124) target = $region20
        $region19: #{tpu_custom_call.1} parent=15 // pred_region
          %s127 = sand.u32 %s57, 1
          %s128 = scalar_lea.sflag [#allocation3], %s127
          %s129 = sand.u32 %s57, 1
          %s130 = smul.addr %s129, 8
          %s131 = scalar_lea.vmem [#allocation2], %s130
          %s132 = smul.u32 %s22, 8
          %s133 = sadd.s32 %s132, %s21
          %s134 = sadd.s32 %s133, %s23
          %s135 = smul.u32 2, %s20
          %s137 = ssub.s32 128, 128
          %138 = vsyncadd %s128, %s137
          %s139 = smul.addr %s135, 8
          %s140 = sadd.s32 %s134, %s139
          %s141 = smul.addr %s140, 64
          %s142 = scalar_lea.hbm %s0, %s141
          %s143 = sshll.u32 %s131, 4
          %s144 = int_to_ptr.vmem [resolvable:$true] %s143
          %149 = dma.hbm_to_vmem [thread:$0]  %s142, 128, %s144, %s128, 512, 64, 4
        $region20: #{tpu_custom_call.1} parent=15 // pred_fallthru
          _
      $region16: #{tpu_custom_call.1} parent=5 // pred_fallthru
        _
      %p150 = scmp.le.s32.totalorder 1, %s13
      %p151 = scmp.lt.s32.totalorder %s13, 9
      %p152 = pnand %p150, %p151
      %p153 = pneg %p152
      // Predicated region
      $region21: #{tpu_custom_call.1} parent=5 // pred_check
        _
      $region22: #{tpu_custom_call.1} parent=5 // pred_check_branch
        %155 = sbr.rel (%p152) target = $region24
      $region23: #{tpu_custom_call.1} parent=5 // pred_region
        %s156 = ssub.s32 %s13, 1
        %s157 = sand.u32 %s60, 1
        %s158 = scalar_lea.sflag [#allocation3], %s157
        %s159 = sand.u32 %s60, 1
        %s160 = smul.addr %s159, 8
        %s161 = scalar_lea.vmem [#allocation2], %s160
        // Predicated region
        $region25: #{tpu_custom_call.1} parent=23 // pred_check
          %p162 = pneg %p73
        $region26: #{tpu_custom_call.1} parent=23 // pred_check_branch
          %164 = sbr.rel (%p162) target = $region28
        $region27: #{tpu_custom_call.1} parent=23 // pred_region
          %165 = dma.done %s158, 128
        $region28: #{tpu_custom_call.1} parent=23 // pred_fallthru
          _
        %s166 = sand.u32 %s60, 1
        %s167 = scalar_lea.sflag [#allocation3], %s166
        %s168 = sand.u32 %s60, 1
        %s169 = smul.addr %s168, 8
        %s170 = scalar_lea.vmem [#allocation2], %s169
        %p171 = pneg %p73
        %p172 = pneg %p70
        %p173 = pneg %p105
        %p174 = pneg %p102
        %s175 = sand.u32 %s92, 1
        %s176 = scalar_lea.sflag [#allocation4], %s175
        %s177 = sand.u32 %s92, 1
        %s178 = smul.addr %s177, 8
        %s179 = scalar_lea.vmem [#allocation5], %s178
        %s180 = smul.u32 %s26, 8
        %s181 = sadd.s32 %s180, %s25
        %s182 = sadd.s32 %s181, %s27
        %s183 = smul.u32 2, %s24
        %s184 = sadd.s32 %s25, %s26
        %s185 = smul.u32 2, %s24
        %v186 = vld [vmem:[%s161] sm:$0xf]
        %v187 = vld [vmem:[%s161 + $0x4] sm:$0xf]
        %188 = vst [vmem:[%s179] sm:$0xf] %v186
        %189 = vst [vmem:[%s179 + $0x4] sm:$0xf] %v187
        %s190 = sand.u32 %s92, 1
        %s191 = scalar_lea.sflag [#allocation4], %s190
        %s192 = sand.u32 %s92, 1
        %s193 = smul.addr %s192, 8
        %s194 = scalar_lea.vmem [#allocation5], %s193
        // Predicated region
        $region29: #{tpu_custom_call.1} parent=23 // pred_check
          %p195 = pneg %p102
        $region30: #{tpu_custom_call.1} parent=23 // pred_check_branch
          %197 = sbr.rel (%p195) target = $region32
        $region31: #{tpu_custom_call.1} parent=23 // pred_region
          %s198 = sadd.s32 %s25, %s26
          %s199 = smul.u32 2, %s24
          %s201 = ssub.s32 128, 128
          %202 = vsyncadd %s191, %s201
          %s203 = sadd.s32 %s27, %s198
          %s204 = smul.addr %s199, 8
          %s205 = sadd.s32 %s203, %s204
          %s206 = smul.addr %s205, 64
          %s207 = scalar_lea.hbm %s1, %s206
          %s208 = sshll.u32 %s194, 4
          %s209 = int_to_ptr.vmem [resolvable:$true] %s208
          %214 = dma.vmem_to_hbm [thread:$0]  %s209, 128, %s207, %s191, 64, 512, 4
        $region32: #{tpu_custom_call.1} parent=23 // pred_fallthru
          _
      $region24: #{tpu_custom_call.1} parent=5 // pred_fallthru
        _
      %p215 = scmp.le.s32.totalorder 2, %s13
      // Predicated region
      $region33: #{tpu_custom_call.1} parent=5 // pred_check
        %p216 = pneg %p215
      $region34: #{tpu_custom_call.1} parent=5 // pred_check_branch
        %218 = sbr.rel (%p216) target = $region36
      $region35: #{tpu_custom_call.1} parent=5 // pred_region
        %s219 = ssub.s32 %s13, 2
        // Predicated region
        $region37: #{tpu_custom_call.1} parent=35 // pred_check
          %p220 = pneg %p108
        $region38: #{tpu_custom_call.1} parent=35 // pred_check_branch
          %222 = sbr.rel (%p220) target = $region40
        $region39: #{tpu_custom_call.1} parent=35 // pred_region
          %s223 = sand.u32 %s93, 1
          %s224 = scalar_lea.sflag [#allocation4], %s223
          %s225 = sand.u32 %s93, 1
          %s226 = smul.addr %s225, 8
          %s227 = scalar_lea.vmem [#allocation5], %s226
          %228 = dma.done %s224, 128
        $region40: #{tpu_custom_call.1} parent=35 // pred_fallthru
          _
      $region36: #{tpu_custom_call.1} parent=5 // pred_fallthru
        _
    $region6: #{tpu_custom_call.1} parent=1 // loop_footer
      %s17 = sadd.s32 1, %s13
    $region7: #{tpu_custom_call.1} parent=1 // loop_footer_branch
      %12 = sbr.rel target = $region3
    $region8: #{tpu_custom_call.1} parent=1 // loop_exit
      _
    %229 = vsyncpa [#allocation3], 1
    %s230 = scalar_lea.sflag [#allocation3], 1
    %231 = vsyncpa %s230, 1
    %232 = vsyncpa [#allocation4], 1
    %s233 = scalar_lea.sflag [#allocation4], 1
    %234 = vsyncpa %s233, 1

</llo_original>
